<compile_context>
chip_gen: v6e
topology: v6e:2x2x1
jax: 0.10.0
libtpu: 0.0.40
codegen_flags: <defaults>
</compile_context>

<pallas_src>
import jax
import jax.numpy as jnp
from jax.experimental import pallas as pl
from jax.experimental.pallas import tpu as pltpu


def _round_up(x, m):
    return ((x + m - 1) // m) * m


def _largest_divisor_chunk(total, target):
    """Largest multiple-of-128 divisor of `total` (a multiple of 128) <= target."""
    n = total // 128
    best = 128
    for d in range(1, n + 1):
        if n % d == 0 and d * 128 <= target:
            best = d * 128
    return best


def _chip_defaults():
    try:
        kind = jax.devices()[0].device_kind.lower()
    except Exception:  # pragma: no cover - defensive
        kind = ""
    if "v5 lite" in kind or "v5e" in kind or "v5litepod" in kind:
        # 197 TF/s MXU -> ~240 FLOPs/byte crossover; 128 MiB physical VMEM.
        return dict(tm=256, tpf=1024, vmem=96 << 20, even_rows=False)
    if "v6" in kind:
        # 918 TF/s MXU -> ~574 FLOPs/byte crossover; 128 MiB physical VMEM.
        return dict(tm=1024, tpf=1024, vmem=100 << 20, even_rows=False)
    if "v7" in kind:
        # 2 TCs share HBM and each re-streams the weights; 64 MiB physical VMEM.
        return dict(tm=512, tpf=512, vmem=52 << 20, even_rows=True)
    # Unknown chip: conservative settings that fit every listed generation.
    return dict(tm=512, tpf=512, vmem=60 << 20, even_rows=False)


def _vmem_footprint(tm, tpf, Hp, x_bytes, out_bytes):
    """Approximate VMEM usage, including implicit matmul intermediates."""
    return (2 * tm * Hp * x_bytes          # double-buffered x block
            + 2 * Hp * tpf * 2             # double-buffered W1 chunk (bf16)
            + 2 * tpf * Hp * 2             # double-buffered W2 chunk (bf16)
            + 2 * tpf * 4 + 2 * Hp * 4     # biases (f32)
            + 2 * tm * Hp * out_bytes      # double-buffered out block
            + tm * Hp * 4                  # resident f32 accumulator scratch
            + 6 * tm * tpf)                # h (f32) + its bf16 cast copy


def ffn_kernel(x_ref, w1_ref, b1_ref, w2_ref, b2_ref, o_ref, acc_ref):
    # x_ref:  (tm, Hp)  f32/bf16    w1_ref: (Hp, tpf) bf16   b1_ref: (1, tpf) f32
    # w2_ref: (tpf, Hp) bf16        b2_ref: (1, Hp)  f32
    # o_ref:  (tm, Hp)  out dtype   acc_ref: (tm, Hp) f32 VMEM scratch
    k = pl.program_id(1)

    # First matmul: bf16 operands, f32 accumulation on the MXU.
    h = jnp.dot(x_ref[...].astype(jnp.bfloat16), w1_ref[...],
                preferred_element_type=jnp.float32)
    h = jnp.maximum(h + b1_ref[...], 0.0)      # bias + ReLU in f32 (VPU)
    # TODO(synk): dropout omitted (eval-mode identity); training-mode dropout
    # would use pltpu.prng_seed + pltpu.prng_random_bits to build a mask here.

    # Second matmul on this PF chunk.
    contrib = jnp.dot(h.astype(jnp.bfloat16), w2_ref[...],
                      preferred_element_type=jnp.float32)

    # Fold the zero-init into the first reduction step.
    @pl.when(k == 0)
    def _():
        acc_ref[...] = contrib

    @pl.when(k > 0)
    def _():
        acc_ref[...] += contrib

    @pl.when(k == pl.num_programs(1) - 1)
    def _():
        o_ref[...] = (acc_ref[...] + b2_ref[...]).astype(o_ref.dtype)


def prepare_ffn_params(w1, b1, w2, b2):
    """Pad + cast the FFN weights ONCE (hoisted out of the per-call path).

    w1: [H, PF], b1: [PF], w2: [PF, H], b2: [H]  — (in, out) layout.
    """
    H, PF = w1.shape
    Hp = _round_up(H, 128)
    PFp = _round_up(PF, 128)
    w1p = jnp.zeros((Hp, PFp), jnp.bfloat16).at[:H, :PF].set(w1.astype(jnp.bfloat16))
    w2p = jnp.zeros((PFp, Hp), jnp.bfloat16).at[:PF, :H].set(w2.astype(jnp.bfloat16))
    b1p = jnp.zeros((1, PFp), jnp.float32).at[0, :PF].set(b1.astype(jnp.float32))
    b2p = jnp.zeros((1, Hp), jnp.float32).at[0, :H].set(b2.astype(jnp.float32))
    return dict(w1=w1p, b1=b1p, w2=w2p, b2=b2p, H=H, PF=PF, Hp=Hp, PFp=PFp)


def positionwise_ffn_prepared(x, params, *, tm=None, tpf=None, out_dtype=None):
    """x: [B, S, H]; params: output of prepare_ffn_params."""
    B, S, H = x.shape
    assert H == params["H"], (H, params["H"])
    Hp, PFp = params["Hp"], params["PFp"]
    M = B * S
    out_dtype = out_dtype or x.dtype
    out_bytes = jnp.dtype(out_dtype).itemsize

    cfg = _chip_defaults()
    tm_target = tm if tm is not None else cfg["tm"]
    tpf_target = tpf if tpf is not None else cfg["tpf"]
    vmem_limit = cfg["vmem"]

    # Row tile: as large as possible (arithmetic intensity == tm), but never
    # over-pad tiny inputs and keep >= the bf16 native (16, 128) sublane tile.
    tm = max(16, min(_round_up(tm_target, 16), _round_up(M, 16)))
    # PF chunk: multiple-of-128 divisor of the padded PF.
    tpf = _largest_divisor_chunk(PFp, max(128, tpf_target))

    # Shrink tiles until the double-buffered blocks + intermediates fit the
    # per-chip VMEM budget (explicitly leaves headroom below v7x's 64 MiB).
    x_bytes = jnp.dtype(x.dtype).itemsize if H == Hp else 2  # padded path is bf16
    while _vmem_footprint(tm, tpf, Hp, x_bytes, out_bytes) > vmem_limit and tm > 128:
        tm = max(128, tm // 2)
    while _vmem_footprint(tm, tpf, Hp, x_bytes, out_bytes) > vmem_limit and tpf > 128:
        tpf = _largest_divisor_chunk(PFp, max(128, tpf // 2))

    Mp = _round_up(M, tm)
    grid_m = Mp // tm
    if cfg["even_rows"] and grid_m > 1 and grid_m % 2 == 1:
        # v7x: force an even split of the "parallel" row axis across both TCs.
        Mp = _round_up(M, 2 * tm)
        grid_m = Mp // tm

    # Fast path: already tile-aligned -> no pad pass, no output slice copy.
    aligned = (M == Mp) and (H == Hp)
    if aligned:
        x2 = x.reshape(M, H)
    else:
        x2 = jnp.zeros((Mp, Hp), jnp.bfloat16).at[:M, :H].set(
            x.reshape(M, H).astype(jnp.bfloat16))

    grid = (grid_m, PFp // tpf)

    cost = pl.CostEstimate(
        flops=4 * Mp * Hp * PFp,
        transcendentals=0,
        bytes_accessed=(x2.size * x2.dtype.itemsize
                        + grid_m * 2 * (params["w1"].size + params["w2"].size)
                        + 4 * (params["b1"].size + params["b2"].size)
                        + Mp * Hp * out_bytes),
    )

    out = pl.pallas_call(
        ffn_kernel,
        out_shape=jax.ShapeDtypeStruct((Mp, Hp), out_dtype),
        grid_spec=pltpu.PrefetchScalarGridSpec(
            num_scalar_prefetch=0,
            grid=grid,
            in_specs=[
                pl.BlockSpec((tm, Hp), lambda i, k: (i, 0)),   # x row tile
                pl.BlockSpec((Hp, tpf), lambda i, k: (0, k)),  # W1 PF-chunk
                pl.BlockSpec((1, tpf), lambda i, k: (0, k)),   # b1 PF-chunk
                pl.BlockSpec((tpf, Hp), lambda i, k: (k, 0)),  # W2 PF-chunk
                pl.BlockSpec((1, Hp), lambda i, k: (0, 0)),    # b2 (resident)
            ],
            out_specs=pl.BlockSpec((tm, Hp), lambda i, k: (i, 0)),
            scratch_shapes=[pltpu.VMEM((tm, Hp), jnp.float32)],
        ),
        compiler_params=pltpu.CompilerParams(
            dimension_semantics=("parallel", "arbitrary"),
            vmem_limit_bytes=vmem_limit,
        ),
        cost_estimate=cost,
    )(x2, params["w1"], params["b1"], params["w2"], params["b2"])

    if aligned:
        return out.reshape(B, S, H)
    return out[:M, :H].reshape(B, S, H)


def positionwise_ffn(x, w1, b1, w2, b2, **kwargs):
    """Convenience wrapper (pads/casts weights per call).  Prefer
    prepare_ffn_params + positionwise_ffn_prepared in a real model."""
    return positionwise_ffn_prepared(x, prepare_ffn_params(w1, b1, w2, b2), **kwargs)


if __name__ == "__main__":
    # Small shapes consistent with the module: batch=2, seq=8, hid_dim=32, pf_dim=64
    B, S, HID, PF = 2, 8, 32, 64
    key = jax.random.PRNGKey(0)
    kx, kw1, kb1, kw2, kb2 = jax.random.split(key, 5)

    x = jax.random.normal(kx, (B, S, HID), dtype=jnp.float32)

    # PyTorch nn.Linear stores weight as (out_features, in_features):
    # fc1.weight -> (PF, HID), fc2.weight -> (HID, PF).
    fc1_w = jax.random.normal(kw1, (PF, HID), dtype=jnp.float32) * 0.05
    fc1_b = jax.random.normal(kb1, (PF,), dtype=jnp.float32) * 0.05
    fc2_w = jax.random.normal(kw2, (HID, PF), dtype=jnp.float32) * 0.05
    fc2_b = jax.random.normal(kb2, (HID,), dtype=jnp.float32) * 0.05

    # Hoisted weight prep: done once, outside the per-forward-call path.
    params = prepare_ffn_params(fc1_w.T, fc1_b, fc2_w.T, fc2_b)

    out = positionwise_ffn_prepared(x, params)
    out = jax.block_until_ready(out)

    # f32 reference (same math as eval-mode PyTorch forward).  Kernel uses
    # bf16 MXU operands with f32 accumulation, so tolerance is loosened.
    ref = jnp.maximum(x @ fc1_w.T + fc1_b, 0.0) @ fc2_w.T + fc2_b
    assert out.shape == (B, S, HID)
    err = float(jnp.max(jnp.abs(out - ref)))
    assert jnp.allclose(out, ref, atol=3e-2, rtol=3e-2), err

    print("KERNEL_OK")
</pallas_src>

<mosaic_0001>
module attributes {stable_mosaic.version = 11 : i64} {
  func.func @ffn_kernel(%arg0: i32, %arg1: i32, %arg2: memref<16x128xbf16, #tpu.memory_space<vmem>>, %arg3: memref<128x128xbf16, #tpu.memory_space<vmem>>, %arg4: memref<1x128xf32, #tpu.memory_space<vmem>>, %arg5: memref<128x128xbf16, #tpu.memory_space<vmem>>, %arg6: memref<1x128xf32, #tpu.memory_space<vmem>>, %arg7: memref<16x128xf32, #tpu.memory_space<vmem>>, %arg8: memref<16x128xf32, #tpu.memory_space<vmem>>) attributes {dimension_semantics = [#tpu.dimension_semantics<parallel>, #tpu.dimension_semantics<arbitrary>], iteration_bounds = array<i64: 1, 1>, scalar_prefetch = 0 : i64, scratch_operands = 1 : i64, tpu.core_type = #tpu.core_type<tc>, window_params = [{transform_indices = @transform_0, window_bounds = array<i64: 16, 128>}, {transform_indices = @transform_1, window_bounds = array<i64: 128, 128>}, {transform_indices = @transform_2, window_bounds = array<i64: 1, 128>}, {transform_indices = @transform_3, window_bounds = array<i64: 128, 128>}, {pipeline_mode = #tpu.pipeline_mode<synchronous>, transform_indices = @transform_4, window_bounds = array<i64: 1, 128>}, {transform_indices = @transform_5, window_bounds = array<i64: 16, 128>}]} {
    %c0 = arith.constant 0 : index
    %c0_0 = arith.constant 0 : index
    %0 = vector.load %arg2[%c0, %c0_0] : memref<16x128xbf16, #tpu.memory_space<vmem>>, vector<16x128xbf16>
    %c0_1 = arith.constant 0 : index
    %c0_2 = arith.constant 0 : index
    %1 = vector.load %arg3[%c0_1, %c0_2] : memref<128x128xbf16, #tpu.memory_space<vmem>>, vector<128x128xbf16>
    %cst = arith.constant dense<0.000000e+00> : vector<16x128xf32>
    %2 = tpu.matmul %0, %1, %cst {dimension_numbers = #tpu.dot_dimension_numbers<[1], [0], [0], [1], [0, 0, 1, 1], [], []>} : vector<16x128xbf16>, vector<128x128xbf16>, vector<16x128xf32> -> vector<16x128xf32>
    %c0_3 = arith.constant 0 : index
    %c0_4 = arith.constant 0 : index
    %3 = vector.load %arg4[%c0_3, %c0_4] : memref<1x128xf32, #tpu.memory_space<vmem>>, vector<1x128xf32>
    %4 = vector.broadcast %3 : vector<1x128xf32> to vector<16x128xf32>
    %5 = arith.addf %2, %4 : vector<16x128xf32>
    %cst_5 = arith.constant 0.000000e+00 : f32
    %6 = vector.broadcast %cst_5 : f32 to vector<16x128xf32>
    %7 = arith.maximumf %5, %6 : vector<16x128xf32>
    %8 = arith.truncf %7 : vector<16x128xf32> to vector<16x128xbf16>
    %c0_6 = arith.constant 0 : index
    %c0_7 = arith.constant 0 : index
    %9 = vector.load %arg5[%c0_6, %c0_7] : memref<128x128xbf16, #tpu.memory_space<vmem>>, vector<128x128xbf16>
    %cst_8 = arith.constant dense<0.000000e+00> : vector<16x128xf32>
    %10 = tpu.matmul %8, %9, %cst_8 {dimension_numbers = #tpu.dot_dimension_numbers<[1], [0], [0], [1], [0, 0, 1, 1], [], []>} : vector<16x128xbf16>, vector<128x128xbf16>, vector<16x128xf32> -> vector<16x128xf32>
    %c0_i32 = arith.constant 0 : i32
    %11 = arith.cmpi eq, %arg1, %c0_i32 : i32
    %12 = arith.extui %11 : i1 to i32
    %c0_i32_9 = arith.constant 0 : i32
    %13 = arith.cmpi ne, %12, %c0_i32_9 : i32
    scf.if %13 {
      %c0_14 = arith.constant 0 : index
      %c0_15 = arith.constant 0 : index
      %20 = vector.load %arg8[%c0_14, %c0_15] : memref<16x128xf32, #tpu.memory_space<vmem>>, vector<16x128xf32>
      tpu.vector_store %arg8[%c0_14, %c0_15], %10 {strides = array<i32>} : memref<16x128xf32, #tpu.memory_space<vmem>>, vector<16x128xf32>,
    } else {
    }
    %c0_i32_10 = arith.constant 0 : i32
    %14 = arith.cmpi sgt, %arg1, %c0_i32_10 : i32
    %15 = arith.extui %14 : i1 to i32
    %c0_i32_11 = arith.constant 0 : i32
    %16 = arith.cmpi ne, %15, %c0_i32_11 : i32
    scf.if %16 {
      %c0_14 = arith.constant 0 : index
      %c0_15 = arith.constant 0 : index
      %20 = vector.load %arg8[%c0_14, %c0_15] : memref<16x128xf32, #tpu.memory_space<vmem>>, vector<16x128xf32>
      %21 = arith.addf %20, %10 : vector<16x128xf32>
      %c0_16 = arith.constant 0 : index
      %c0_17 = arith.constant 0 : index
      %22 = vector.load %arg8[%c0_16, %c0_17] : memref<16x128xf32, #tpu.memory_space<vmem>>, vector<16x128xf32>
      tpu.vector_store %arg8[%c0_16, %c0_17], %21 {strides = array<i32>} : memref<16x128xf32, #tpu.memory_space<vmem>>, vector<16x128xf32>,
    } else {
    }
    %c0_i32_12 = arith.constant 0 : i32
    %17 = arith.cmpi eq, %arg1, %c0_i32_12 : i32
    %18 = arith.extui %17 : i1 to i32
    %c0_i32_13 = arith.constant 0 : i32
    %19 = arith.cmpi ne, %18, %c0_i32_13 : i32
    scf.if %19 {
      %c0_14 = arith.constant 0 : index
      %c0_15 = arith.constant 0 : index
      %20 = vector.load %arg8[%c0_14, %c0_15] : memref<16x128xf32, #tpu.memory_space<vmem>>, vector<16x128xf32>
      %c0_16 = arith.constant 0 : index
      %c0_17 = arith.constant 0 : index
      %21 = vector.load %arg6[%c0_16, %c0_17] : memref<1x128xf32, #tpu.memory_space<vmem>>, vector<1x128xf32>
      %22 = vector.broadcast %21 : vector<1x128xf32> to vector<16x128xf32>
      %23 = arith.addf %20, %22 : vector<16x128xf32>
      %c0_18 = arith.constant 0 : index
      %c0_19 = arith.constant 0 : index
      %24 = vector.load %arg7[%c0_18, %c0_19] : memref<16x128xf32, #tpu.memory_space<vmem>>, vector<16x128xf32>
      tpu.vector_store %arg7[%c0_18, %c0_19], %23 {strides = array<i32>} : memref<16x128xf32, #tpu.memory_space<vmem>>, vector<16x128xf32>,
    } else {
    }
    return
  }
  func.func @transform_0(%arg0: i32, %arg1: i32) -> (i32, i32) {
    %c0_i32 = arith.constant 0 : i32
    %c0_i32_0 = arith.constant 0 : i32
    return %arg0, %c0_i32 : i32, i32
  }
  func.func @transform_1(%arg0: i32, %arg1: i32) -> (i32, i32) {
    %c0_i32 = arith.constant 0 : i32
    %c0_i32_0 = arith.constant 0 : i32
    return %c0_i32, %arg1 : i32, i32
  }
  func.func @transform_2(%arg0: i32, %arg1: i32) -> (i32, i32) {
    %c0_i32 = arith.constant 0 : i32
    %c0_i32_0 = arith.constant 0 : i32
    return %c0_i32, %arg1 : i32, i32
  }
  func.func @transform_3(%arg0: i32, %arg1: i32) -> (i32, i32) {
    %c0_i32 = arith.constant 0 : i32
    %c0_i32_0 = arith.constant 0 : i32
    return %arg1, %c0_i32 : i32, i32
  }
  func.func @transform_4(%arg0: i32, %arg1: i32) -> (i32, i32) {
    %c0_i32 = arith.constant 0 : i32
    %c0_i32_0 = arith.constant 0 : i32
    %c0_i32_1 = arith.constant 0 : i32
    return %c0_i32, %c0_i32_0 : i32, i32
  }
  func.func @transform_5(%arg0: i32, %arg1: i32) -> (i32, i32) {
    %c0_i32 = arith.constant 0 : i32
    %c0_i32_0 = arith.constant 0 : i32
    return %arg0, %c0_i32 : i32, i32
  }
}

</mosaic_0001>

<llo_original>
// kernel: tpu_custom_call.1
$region0: #{tpu_custom_call.1}
  #allocation0 [shape = 'u32[]', space=smem, size = 0x4, offset = 0x4, fixed_abs, tag = 'smem constant byte address 0x4 - core index']
  #allocation1 [shape = 'u32[144,128]{1,0:T(1,128)}', space=vmem, size = 0x12000, scoped, tag = 'internal scratch']
  #allocation2 [shape = 'f32[16,128]{1,0:T(8,128)}', space=vmem, size = 0x2000, scoped, tag = 'scratch operand']
  %s0 = inlined_call_operand.hbm [shape: bf16[16,128], index: 0, kind: input, shape index: {}]
  %s1 = inlined_call_operand.hbm [shape: bf16[128,128], index: 1, kind: input, shape index: {}]
  %s2 = inlined_call_operand.vmem [shape: f32[1,128], index: 2, kind: input, shape index: {}]
  %s3 = inlined_call_operand.hbm [shape: bf16[128,128], index: 3, kind: input, shape index: {}]
  %s4 = inlined_call_operand.vmem [shape: f32[1,128], index: 4, kind: input, shape index: {}]
  %s5 = inlined_call_operand.hbm [shape: f32[16,128], index: 5, kind: output, shape index: {}]
  %s6 = sld [smem:[#allocation0]]
  $region54: #{tpu_custom_call.1} parent=0
    _
  %s8 = ssub.s32 1, %s6
  %s9 = scalar_select 0, %s8, %s6
  $region1: #{tpu_custom_call.1} parent=0
    #allocation3 [shape = 'u8[4096]{0}', space=vmem, size = 0x1000, scoped, tag = 'input window, operand 0, single buffered']
    #allocation4 [shape = 's32[1]{0}', space=sflag, size = 0x4, scoped, tag = 'scoped memory for tpu_custom_call.1']
    #allocation5 [shape = 's32[1]{0}', space=sflag, size = 0x4, scoped, tag = 'scoped memory for tpu_custom_call.1']
    #allocation6 [shape = 'u8[32768]{0}', space=vmem, size = 0x8000, scoped, tag = 'input window, operand 1, single buffered']
    #allocation7 [shape = 's32[1]{0}', space=sflag, size = 0x4, scoped, tag = 'scoped memory for tpu_custom_call.1']
    #allocation8 [shape = 'u8[32768]{0}', space=vmem, size = 0x8000, scoped, tag = 'input window, operand 3, single buffered']
    #allocation9 [shape = 'u8[8192]{0}', space=vmem, size = 0x2000, scoped, tag = 'output window, operand 0, single buffered']
    %10 = vsyncpa [#allocation4], 0
    %11 = vsyncpa [#allocation7], 0
    %12 = vsyncpa [#allocation5], 0
    // Predicated region
    $region2: #{tpu_custom_call.1} parent=1 // pred_check
      _
    $region3: #{tpu_custom_call.1} parent=1 // pred_check_branch
      %14 = sbr.rel (0) target = $region5
    $region4: #{tpu_custom_call.1} parent=1 // pred_region
      %s16 = ssub.s32 128, 128
      %17 = vsyncadd [#allocation4], %s16
      %s18 = sshll.u32 [#allocation3], 4
      %s19 = int_to_ptr.vmem [resolvable:$true] %s18
      %24 = dma.hbm_to_vmem [thread:$0]  %s0, 128, %s19, [#allocation4], 64, 64, 4
    $region5: #{tpu_custom_call.1} parent=1 // pred_fallthru
      _
    // Predicated region
    $region6: #{tpu_custom_call.1} parent=1 // pred_check
      _
    $region7: #{tpu_custom_call.1} parent=1 // pred_check_branch
      %26 = sbr.rel (0) target = $region9
    $region8: #{tpu_custom_call.1} parent=1 // pred_region
      %s28 = ssub.s32 1024, 1024
      %29 = vsyncadd [#allocation7], %s28
      %s30 = sshll.u32 [#allocation6], 4
      %s31 = int_to_ptr.vmem [resolvable:$true] %s30
      %36 = dma.hbm_to_vmem [thread:$0]  %s1, 1024, %s31, [#allocation7], 64, 64, 4
    $region9: #{tpu_custom_call.1} parent=1 // pred_fallthru
      _
    // Predicated region
    $region10: #{tpu_custom_call.1} parent=1 // pred_check
      _
    $region11: #{tpu_custom_call.1} parent=1 // pred_check_branch
      %38 = sbr.rel (0) target = $region13
    $region12: #{tpu_custom_call.1} parent=1 // pred_region
      _
    $region13: #{tpu_custom_call.1} parent=1 // pred_fallthru
      _
    // Predicated region
    $region14: #{tpu_custom_call.1} parent=1 // pred_check
      _
    $region15: #{tpu_custom_call.1} parent=1 // pred_check_branch
      %40 = sbr.rel (0) target = $region17
    $region16: #{tpu_custom_call.1} parent=1 // pred_region
      %s42 = ssub.s32 1024, 1024
      %43 = vsyncadd [#allocation7], %s42
      %s44 = sshll.u32 [#allocation8], 4
      %s45 = int_to_ptr.vmem [resolvable:$true] %s44
      %50 = dma.hbm_to_vmem [thread:$0]  %s3, 1024, %s45, [#allocation7], 64, 64, 4
    $region17: #{tpu_custom_call.1} parent=1 // pred_fallthru
      _
    // Predicated region
    $region18: #{tpu_custom_call.1} parent=1 // pred_check
      _
    $region19: #{tpu_custom_call.1} parent=1 // pred_check_branch
      %52 = sbr.rel (0) target = $region21
    $region20: #{tpu_custom_call.1} parent=1 // pred_region
      _
    $region21: #{tpu_custom_call.1} parent=1 // pred_fallthru
      _
    // Predicated region
    $region22: #{tpu_custom_call.1} parent=1 // pred_check
      _
    $region23: #{tpu_custom_call.1} parent=1 // pred_check_branch
      %54 = sbr.rel (0) target = $region25
    $region24: #{tpu_custom_call.1} parent=1 // pred_region
      %55 = dma.done [#allocation4], 128
    $region25: #{tpu_custom_call.1} parent=1 // pred_fallthru
      _
    // Predicated region
    $region26: #{tpu_custom_call.1} parent=1 // pred_check
      _
    $region27: #{tpu_custom_call.1} parent=1 // pred_check_branch
      %57 = sbr.rel (0) target = $region29
    $region28: #{tpu_custom_call.1} parent=1 // pred_region
      %58 = dma.done [#allocation7], 1024
    $region29: #{tpu_custom_call.1} parent=1 // pred_fallthru
      _
    // Predicated region
    $region30: #{tpu_custom_call.1} parent=1 // pred_check
      _
    $region31: #{tpu_custom_call.1} parent=1 // pred_check_branch
      %60 = sbr.rel (0) target = $region33
    $region32: #{tpu_custom_call.1} parent=1 // pred_region
      %61 = dma.done [#allocation7], 1024
    $region33: #{tpu_custom_call.1} parent=1 // pred_fallthru
      _
    %v63 = vld [vmem:[#allocation3] sm:$0xf]
    %v64 = vld [vmem:[#allocation3 + $0x4] sm:$0xf]
    %v65 = vld [vmem:[#allocation6] sm:$0xf]
    %v66 = vld [vmem:[#allocation6 + $0x4] sm:$0xf]
    %v67 = vld [vmem:[#allocation6 + $0x8] sm:$0xf]
    %v68 = vld [vmem:[#allocation6 + $0xc] sm:$0xf]
    %v69 = vld [vmem:[#allocation6 + $0x10] sm:$0xf]
    %v70 = vld [vmem:[#allocation6 + $0x14] sm:$0xf]
    %v71 = vld [vmem:[#allocation6 + $0x18] sm:$0xf]
    %v72 = vld [vmem:[#allocation6 + $0x1c] sm:$0xf]
    %v73 = vld [vmem:[#allocation6 + $0x20] sm:$0xf]
    %v74 = vld [vmem:[#allocation6 + $0x24] sm:$0xf]
    %v75 = vld [vmem:[#allocation6 + $0x28] sm:$0xf]
    %v76 = vld [vmem:[#allocation6 + $0x2c] sm:$0xf]
    %v77 = vld [vmem:[#allocation6 + $0x30] sm:$0xf]
    %v78 = vld [vmem:[#allocation6 + $0x34] sm:$0xf]
    %v79 = vld [vmem:[#allocation6 + $0x38] sm:$0xf]
    %v80 = vld [vmem:[#allocation6 + $0x3c] sm:$0xf]
    %v81 = vld [vmem:[%s2] sm:$0x1]
    %v83 = vlaneseq
    %v84 = vshrl.u32 %v83, 7
    %v85 = vsub.s32 0, %v84
    %v86 = vrot.slane %v81, %v85
    %v90 = vunpack.c.l.b16 %v63
    %v91 = vunpack.c.l.b16 %v64
    %v92 = vpack.c.b16 %v91, %v90
    %v110 = vunpack.c.l.b16 %v65
    %v111 = vunpack.c.l.b16 %v66
    %v112 = vunpack.c.l.b16 %v67
    %v113 = vunpack.c.l.b16 %v68
    %v114 = vunpack.c.l.b16 %v69
    %v115 = vunpack.c.l.b16 %v70
    %v116 = vunpack.c.l.b16 %v71
    %v117 = vunpack.c.l.b16 %v72
    %v118 = vunpack.c.l.b16 %v73
    %v119 = vunpack.c.l.b16 %v74
    %v120 = vunpack.c.l.b16 %v75
    %v121 = vunpack.c.l.b16 %v76
    %v122 = vunpack.c.l.b16 %v77
    %v123 = vunpack.c.l.b16 %v78
    %v124 = vunpack.c.l.b16 %v79
    %v125 = vunpack.c.l.b16 %v80
    %v126 = vpack.c.b16 %v111, %v110
    %v127 = vpack.c.b16 %v113, %v112
    %v128 = vpack.c.b16 %v115, %v114
    %v129 = vpack.c.b16 %v117, %v116
    %v130 = vpack.c.b16 %v119, %v118
    %v131 = vpack.c.b16 %v121, %v120
    %v132 = vpack.c.b16 %v123, %v122
    %v133 = vpack.c.b16 %v125, %v124
    %142 = vmatprep.subr.bf16.mxu0 0
    %143 = vmatpush1.bf16.msra.mxu0 %v133
    %144 = vmatprep.subr.bf16.mxu0 0
    %145 = vmatpush1.bf16.msra.mxu0 %v132
    %146 = vmatprep.subr.bf16.mxu0 0
    %147 = vmatpush1.bf16.msra.mxu0 %v131
    %148 = vmatprep.subr.bf16.mxu0 0
    %149 = vmatpush1.bf16.msra.mxu0 %v130
    %150 = vmatprep.subr.bf16.mxu0 0
    %151 = vmatpush1.bf16.msra.mxu0 %v129
    %152 = vmatprep.subr.bf16.mxu0 0
    %153 = vmatpush1.bf16.msra.mxu0 %v128
    %154 = vmatprep.subr.bf16.mxu0 0
    %155 = vmatpush1.bf16.msra.mxu0 %v127
    %156 = vmatprep.subr.bf16.mxu0 0
    %157 = vmatpush1.bf16.msra.mxu0 %v126
    %158 = vmatprep.subr.bf16.mxu0 0
    %159 = vmatpush2.bf16.msra.mxu0 0
    %160 = vmatprep.subr.bf16.mxu0 0
    %161 = vmatpush2.bf16.msra.mxu0 0
    %162 = vmatprep.subr.bf16.mxu0 0
    %163 = vmatpush2.bf16.msra.mxu0 0
    %164 = vmatprep.subr.bf16.mxu0 0
    %165 = vmatpush2.bf16.msra.mxu0 0
    %166 = vmatprep.subr.bf16.mxu0 0
    %167 = vmatpush2.bf16.msra.mxu0 0
    %168 = vmatprep.subr.bf16.mxu0 0
    %169 = vmatpush2.bf16.msra.mxu0 0
    %170 = vmatprep.subr.bf16.mxu0 0
    %171 = vmatpush2.bf16.msra.mxu0 0
    %172 = vmatprep.subr.bf16.mxu0 0
    %173 = vmatpush2.bf16.msra.mxu0 0
    %174 = vmatprep.mubr.bf16.mxu0 0
    %175 = vmatmul.mubr.bf16.gmra.mxu0 %v92
    %v176 = vpop.f32.mrf.mxu0
    %v177 = vadd.f32 %v86, %v176
    %v178 = vpop.f32.mrf.mxu0
    %v179 = vpop.f32.mrf.mxu0
    %v180 = vadd.f32 %v86, %v179
    %v181 = vpop.f32.mrf.mxu0
    %182 = vdwg.mxu0
    %v183 = vmax.f32 %v177, 0.0
    %v184 = vmax.f32 %v180, 0.0
    %v185 = vpack.c.bf16 %v184, %v183
    %v186 = vld [vmem:[#allocation8] sm:$0xf]
    %v187 = vld [vmem:[#allocation8 + $0x4] sm:$0xf]
    %v188 = vld [vmem:[#allocation8 + $0x8] sm:$0xf]
    %v189 = vld [vmem:[#allocation8 + $0xc] sm:$0xf]
    %v190 = vld [vmem:[#allocation8 + $0x10] sm:$0xf]
    %v191 = vld [vmem:[#allocation8 + $0x14] sm:$0xf]
    %v192 = vld [vmem:[#allocation8 + $0x18] sm:$0xf]
    %v193 = vld [vmem:[#allocation8 + $0x1c] sm:$0xf]
    %v194 = vld [vmem:[#allocation8 + $0x20] sm:$0xf]
    %v195 = vld [vmem:[#allocation8 + $0x24] sm:$0xf]
    %v196 = vld [vmem:[#allocation8 + $0x28] sm:$0xf]
    %v197 = vld [vmem:[#allocation8 + $0x2c] sm:$0xf]
    %v198 = vld [vmem:[#allocation8 + $0x30] sm:$0xf]
    %v199 = vld [vmem:[#allocation8 + $0x34] sm:$0xf]
    %v200 = vld [vmem:[#allocation8 + $0x38] sm:$0xf]
    %v201 = vld [vmem:[#allocation8 + $0x3c] sm:$0xf]
    %v218 = vunpack.c.l.b16 %v186
    %v219 = vunpack.c.l.b16 %v187
    %v220 = vunpack.c.l.b16 %v188
    %v221 = vunpack.c.l.b16 %v189
    %v222 = vunpack.c.l.b16 %v190
    %v223 = vunpack.c.l.b16 %v191
    %v224 = vunpack.c.l.b16 %v192
    %v225 = vunpack.c.l.b16 %v193
    %v226 = vunpack.c.l.b16 %v194
    %v227 = vunpack.c.l.b16 %v195
    %v228 = vunpack.c.l.b16 %v196
    %v229 = vunpack.c.l.b16 %v197
    %v230 = vunpack.c.l.b16 %v198
    %v231 = vunpack.c.l.b16 %v199
    %v232 = vunpack.c.l.b16 %v200
    %v233 = vunpack.c.l.b16 %v201
    %v234 = vpack.c.b16 %v219, %v218
    %v235 = vpack.c.b16 %v221, %v220
    %v236 = vpack.c.b16 %v223, %v222
    %v237 = vpack.c.b16 %v225, %v224
    %v238 = vpack.c.b16 %v227, %v226
    %v239 = vpack.c.b16 %v229, %v228
    %v240 = vpack.c.b16 %v231, %v230
    %v241 = vpack.c.b16 %v233, %v232
    %250 = vmatprep.subr.bf16.mxu0 0
    %251 = vmatpush1.bf16.msra.mxu0 %v241
    %252 = vmatprep.subr.bf16.mxu0 0
    %253 = vmatpush1.bf16.msra.mxu0 %v240
    %254 = vmatprep.subr.bf16.mxu0 0
    %255 = vmatpush1.bf16.msra.mxu0 %v239
    %256 = vmatprep.subr.bf16.mxu0 0
    %257 = vmatpush1.bf16.msra.mxu0 %v238
    %258 = vmatprep.subr.bf16.mxu0 0
    %259 = vmatpush1.bf16.msra.mxu0 %v237
    %260 = vmatprep.subr.bf16.mxu0 0
    %261 = vmatpush1.bf16.msra.mxu0 %v236
    %262 = vmatprep.subr.bf16.mxu0 0
    %263 = vmatpush1.bf16.msra.mxu0 %v235
    %264 = vmatprep.subr.bf16.mxu0 0
    %265 = vmatpush1.bf16.msra.mxu0 %v234
    %266 = vmatprep.subr.bf16.mxu0 0
    %267 = vmatpush2.bf16.msra.mxu0 0
    %268 = vmatprep.subr.bf16.mxu0 0
    %269 = vmatpush2.bf16.msra.mxu0 0
    %270 = vmatprep.subr.bf16.mxu0 0
    %271 = vmatpush2.bf16.msra.mxu0 0
    %272 = vmatprep.subr.bf16.mxu0 0
    %273 = vmatpush2.bf16.msra.mxu0 0
    %274 = vmatprep.subr.bf16.mxu0 0
    %275 = vmatpush2.bf16.msra.mxu0 0
    %276 = vmatprep.subr.bf16.mxu0 0
    %277 = vmatpush2.bf16.msra.mxu0 0
    %278 = vmatprep.subr.bf16.mxu0 0
    %279 = vmatpush2.bf16.msra.mxu0 0
    %280 = vmatprep.subr.bf16.mxu0 0
    %281 = vmatpush2.bf16.msra.mxu0 0
    %282 = vmatprep.mubr.bf16.mxu0 0
    %283 = vmatmul.mubr.bf16.gmra.mxu0 %v185
    %v284 = vpop.f32.mrf.mxu0
    %v285 = vadd.f32 0.0, %v284
    %v286 = vpop.f32.mrf.mxu0
    %v287 = vpop.f32.mrf.mxu0
    %v288 = vadd.f32 0.0, %v287
    %v289 = vpop.f32.mrf.mxu0
    %290 = vdwg.mxu0
    %p291 = scmp.eq.s32.totalorder 0, 0
    // Predicated region
    $region34: #{tpu_custom_call.1} parent=1 // pred_check
      %p292 = pneg %p291
    $region35: #{tpu_custom_call.1} parent=1 // pred_check_branch
      %294 = sbr.rel (%p292) target = $region37
    $region36: #{tpu_custom_call.1} parent=1 // pred_region
      %295 = vst [vmem:[#allocation2] sm:$0xff] %v285
      %296 = vst [vmem:[#allocation2 + $0x8] sm:$0xff] %v288
    $region37: #{tpu_custom_call.1} parent=1 // pred_fallthru
      _
    %p297 = scmp.gt.s32.totalorder 0, 0
    // Predicated region
    $region38: #{tpu_custom_call.1} parent=1 // pred_check
      %p298 = pneg %p297
    $region39: #{tpu_custom_call.1} parent=1 // pred_check_branch
      %300 = sbr.rel (%p298) target = $region41
    $region40: #{tpu_custom_call.1} parent=1 // pred_region
      %v301 = vld [vmem:[#allocation2] sm:$0xff]
      %v302 = vld [vmem:[#allocation2 + $0x8] sm:$0xff]
      %v303 = vadd.f32 %v301, %v285
      %v304 = vadd.f32 %v302, %v288
      %305 = vst [vmem:[#allocation2] sm:$0xff] %v303
      %306 = vst [vmem:[#allocation2 + $0x8] sm:$0xff] %v304
    $region41: #{tpu_custom_call.1} parent=1 // pred_fallthru
      _
    // Predicated region
    $region42: #{tpu_custom_call.1} parent=1 // pred_check
      %p307 = pneg %p291
    $region43: #{tpu_custom_call.1} parent=1 // pred_check_branch
      %309 = sbr.rel (%p307) target = $region45
    $region44: #{tpu_custom_call.1} parent=1 // pred_region
      %v310 = vld [vmem:[#allocation2] sm:$0xff]
      %v311 = vld [vmem:[#allocation2 + $0x8] sm:$0xff]
      %v312 = vld [vmem:[%s4] sm:$0x1]
      %v314 = vlaneseq
      %v315 = vshrl.u32 %v314, 7
      %v316 = vsub.s32 0, %v315
      %v317 = vrot.slane %v312, %v316
      %v319 = vadd.f32 %v310, %v317
      %v320 = vadd.f32 %v311, %v317
      %321 = vst [vmem:[#allocation9] sm:$0xff] %v319
      %322 = vst [vmem:[#allocation9 + $0x8] sm:$0xff] %v320
    $region45: #{tpu_custom_call.1} parent=1 // pred_fallthru
      _
    // Predicated region
    $region46: #{tpu_custom_call.1} parent=1 // pred_check
      _
    $region47: #{tpu_custom_call.1} parent=1 // pred_check_branch
      %324 = sbr.rel (0) target = $region49
    $region48: #{tpu_custom_call.1} parent=1 // pred_region
      %s326 = ssub.s32 256, 256
      %327 = vsyncadd [#allocation5], %s326
      %s328 = sshll.u32 [#allocation9], 4
      %s329 = int_to_ptr.vmem [resolvable:$true] %s328
      %334 = dma.vmem_to_hbm [thread:$0]  %s329, 256, %s5, [#allocation5], 128, 128, 8
    $region49: #{tpu_custom_call.1} parent=1 // pred_fallthru
      _
    // Predicated region
    $region50: #{tpu_custom_call.1} parent=1 // pred_check
      _
    $region51: #{tpu_custom_call.1} parent=1 // pred_check_branch
      %336 = sbr.rel (0) target = $region53
    $region52: #{tpu_custom_call.1} parent=1 // pred_region
      %337 = dma.done [#allocation5], 256
    $region53: #{tpu_custom_call.1} parent=1 // pred_fallthru
      _
    %338 = vsyncpa [#allocation4], 1
    %339 = vsyncpa [#allocation7], 1
    %340 = vsyncpa [#allocation5], 1

</llo_original>
